<compile_context>
chip_gen: v6e
topology: v6e:2x2x1
jax: 0.10.0
libtpu: 0.0.40
codegen_flags: <defaults>
</compile_context>

<pallas_src>
import functools

import jax
import jax.numpy as jnp
from jax.experimental import pallas as pl
from jax.experimental.pallas import tpu as pltpu

_LANE = 128
_SUBLANE = 8


def _round_up(x, m):
    return (x + m - 1) // m * m


# ----------------------------------------------------------------------------
# Fused Pallas kernel: whole MLPBase forward for one M-tile.
# ----------------------------------------------------------------------------
def _mlp_base_kernel(x_ref,
                     wc1_ref, bc1_ref, wc2_ref, bc2_ref,
                     wa1_ref, ba1_ref, wa2_ref, ba2_ref,
                     wcl_ref, bcl_ref,
                     value_ref, actor_ref):
    x = x_ref[...]

    # Critic tower: Linear -> tanh -> Linear -> tanh (all VMEM resident).
    hc = jnp.tanh(
        jnp.dot(x, wc1_ref[...], preferred_element_type=jnp.float32)
        + bc1_ref[...])
    hc = jnp.tanh(
        jnp.dot(hc, wc2_ref[...], preferred_element_type=jnp.float32)
        + bc2_ref[...])

    # Actor tower.
    ha = jnp.tanh(
        jnp.dot(x, wa1_ref[...], preferred_element_type=jnp.float32)
        + ba1_ref[...])
    ha = jnp.tanh(
        jnp.dot(ha, wa2_ref[...], preferred_element_type=jnp.float32)
        + ba2_ref[...])

    # Fused critic head: value computed from VMEM-resident hidden_critic.
    v = (jnp.dot(hc, wcl_ref[...], preferred_element_type=jnp.float32)
         + bcl_ref[...])

    value_ref[...] = v.astype(value_ref.dtype)
    actor_ref[...] = ha.astype(actor_ref.dtype)


# ----------------------------------------------------------------------------
# Parameter init (orthogonal weights, zero biases) and one-time padding.
# ----------------------------------------------------------------------------
def _orthogonal(key, shape, gain=1.0):
    rows, cols = shape[0], 1
    for s in shape[1:]:
        cols *= s
    flat = jax.random.normal(key, (max(rows, cols), min(rows, cols)),
                             jnp.float32)
    q, r = jnp.linalg.qr(flat)
    q = q * jnp.sign(jnp.diagonal(r))
    if rows < cols:
        q = q.T
    return (gain * q[:rows, :cols]).reshape(shape)


def make_params(num_inputs, hidden_size, seed=42):
    """PyTorch-layout params: Linear weights are (out_features, in_features)."""
    gain = jnp.sqrt(2.0)
    keys = jax.random.split(jax.random.PRNGKey(seed), 5)
    zeros = lambda n: jnp.zeros((n,), jnp.float32)
    return {
        "critic_fc1_w": _orthogonal(keys[0], (hidden_size, num_inputs), gain),
        "critic_fc1_b": zeros(hidden_size),
        "critic_fc2_w": _orthogonal(keys[1], (hidden_size, hidden_size), gain),
        "critic_fc2_b": zeros(hidden_size),
        "actor_fc1_w": _orthogonal(keys[2], (hidden_size, num_inputs), gain),
        "actor_fc1_b": zeros(hidden_size),
        "actor_fc2_w": _orthogonal(keys[3], (hidden_size, hidden_size), gain),
        "actor_fc2_b": zeros(hidden_size),
        "critic_linear_w": _orthogonal(keys[4], (1, hidden_size), gain),
        "critic_linear_b": zeros(1),
    }


def prepare_padded_params(params, hidden_size):
    """One-time transform: transpose to (K, N) and zero-pad N (and the hidden
    K of layer-2 weights) to a lane-dense multiple of 128.  Zero padding is
    mathematically inert: padded hidden columns are tanh(0)=0 and padded
    weight rows/cols are zero."""
    hp = max(_round_up(hidden_size, _LANE), _LANE)

    def pad_w(w, in_pad=None):
        wt = jnp.asarray(w, jnp.float32).T            # (in, out)
        in_dim, out_dim = wt.shape
        ip = in_dim if in_pad is None else in_pad
        return jnp.pad(wt, ((0, ip - in_dim), (0, hp - out_dim)))

    def pad_b(b):
        b = jnp.asarray(b, jnp.float32)
        return jnp.pad(b, (0, hp - b.shape[0])).reshape(1, hp)

    return {
        "wc1": pad_w(params["critic_fc1_w"]),
        "bc1": pad_b(params["critic_fc1_b"]),
        "wc2": pad_w(params["critic_fc2_w"], in_pad=hp),
        "bc2": pad_b(params["critic_fc2_b"]),
        "wa1": pad_w(params["actor_fc1_w"]),
        "ba1": pad_b(params["actor_fc1_b"]),
        "wa2": pad_w(params["actor_fc2_w"], in_pad=hp),
        "ba2": pad_b(params["actor_fc2_b"]),
        "wcl": pad_w(params["critic_linear_w"], in_pad=hp),
        "bcl": pad_b(params["critic_linear_b"]),
    }


# ----------------------------------------------------------------------------
# MLPBase.forward  (recurrent=False, embed_size=0)
# ----------------------------------------------------------------------------
@functools.partial(jax.jit, static_argnames=("hidden_size", "tile_m"))
def mlp_base_forward(padded, inputs, rnn_hxs, masks, embeddings=None, *,
                     hidden_size, tile_m=512):
    # TODO(synk): recurrent (GRU) branch is not implemented; this matches the
    # default MLPBase config (recurrent=False), where masks/rnn_hxs are
    # passed through untouched.
    del masks
    x = inputs.astype(jnp.float32)
    if embeddings is not None:
        x = jnp.concatenate([x, embeddings.astype(jnp.float32)], axis=1)

    m, k = x.shape
    hp = padded["wc1"].shape[1]

    tm = min(tile_m, _round_up(m, _SUBLANE))
    mp = _round_up(m, tm)
    if mp != m:
        x = jnp.pad(x, ((0, mp - m), (0, 0)))

    def full_spec(arr):
        return pl.BlockSpec(arr.shape, lambda i: (0, 0))

    value_p, actor_p = pl.pallas_call(
        _mlp_base_kernel,
        out_shape=(jax.ShapeDtypeStruct((mp, hp), jnp.float32),
                   jax.ShapeDtypeStruct((mp, hp), jnp.float32)),
        grid=(mp // tm,),
        in_specs=[
            pl.BlockSpec((tm, k), lambda i: (i, 0)),        # x: tiled over M
            full_spec(padded["wc1"]), full_spec(padded["bc1"]),
            full_spec(padded["wc2"]), full_spec(padded["bc2"]),
            full_spec(padded["wa1"]), full_spec(padded["ba1"]),
            full_spec(padded["wa2"]), full_spec(padded["ba2"]),
            full_spec(padded["wcl"]), full_spec(padded["bcl"]),
        ],
        out_specs=(pl.BlockSpec((tm, hp), lambda i: (i, 0)),
                   pl.BlockSpec((tm, hp), lambda i: (i, 0))),
        compiler_params=pltpu.CompilerParams(
            dimension_semantics=("parallel",)),               # 2 TCs on v7x
    )(x, padded["wc1"], padded["bc1"], padded["wc2"], padded["bc2"],
      padded["wa1"], padded["ba1"], padded["wa2"], padded["ba2"],
      padded["wcl"], padded["bcl"])

    value = value_p[:m, :1]
    hidden_actor = actor_p[:m, :hidden_size]
    return value, hidden_actor, rnn_hxs


# ----------------------------------------------------------------------------
# Plain-JAX reference (PyTorch semantics) for a correctness check.
# ----------------------------------------------------------------------------
def _reference_forward(params, x):
    lin = lambda a, w, b: a @ jnp.asarray(w).T + jnp.asarray(b)
    hc = jnp.tanh(lin(x, params["critic_fc1_w"], params["critic_fc1_b"]))
    hc = jnp.tanh(lin(hc, params["critic_fc2_w"], params["critic_fc2_b"]))
    ha = jnp.tanh(lin(x, params["actor_fc1_w"], params["actor_fc1_b"]))
    ha = jnp.tanh(lin(ha, params["actor_fc2_w"], params["actor_fc2_b"]))
    v = lin(hc, params["critic_linear_w"], params["critic_linear_b"])
    return v, ha


if __name__ == "__main__":
    batch = 2
    num_inputs = 16
    hidden_size = 64        # MLPBase default

    params = make_params(num_inputs, hidden_size)
    padded = prepare_padded_params(params, hidden_size)

    key = jax.random.PRNGKey(0)
    inputs = jax.random.normal(key, (batch, num_inputs), jnp.float32)
    rnn_hxs = jnp.zeros((batch, 1), jnp.float32)   # recurrent_hidden_state_size = 1
    masks = jnp.ones((batch, 1), jnp.float32)

    value, hidden_actor, hxs_out = mlp_base_forward(
        padded, inputs, rnn_hxs, masks, hidden_size=hidden_size)
    jax.block_until_ready((value, hidden_actor, hxs_out))

    assert value.shape == (batch, 1)
    assert hidden_actor.shape == (batch, hidden_size)
    assert hxs_out.shape == (batch, 1)

    v_ref, a_ref = _reference_forward(params, inputs)
    assert jnp.allclose(value, v_ref, atol=5e-3, rtol=5e-3)
    assert jnp.allclose(hidden_actor, a_ref, atol=5e-3, rtol=5e-3)

    print("KERNEL_OK")
</pallas_src>

<mosaic_0001>
module attributes {stable_mosaic.version = 11 : i64} {
  func.func @_mlp_base_kernel(%arg0: i32, %arg1: memref<8x16xf32, #tpu.memory_space<vmem>>, %arg2: memref<16x128xf32, #tpu.memory_space<vmem>>, %arg3: memref<1x128xf32, #tpu.memory_space<vmem>>, %arg4: memref<128x128xf32, #tpu.memory_space<vmem>>, %arg5: memref<1x128xf32, #tpu.memory_space<vmem>>, %arg6: memref<16x128xf32, #tpu.memory_space<vmem>>, %arg7: memref<1x128xf32, #tpu.memory_space<vmem>>, %arg8: memref<128x128xf32, #tpu.memory_space<vmem>>, %arg9: memref<1x128xf32, #tpu.memory_space<vmem>>, %arg10: memref<128x128xf32, #tpu.memory_space<vmem>>, %arg11: memref<1x128xf32, #tpu.memory_space<vmem>>, %arg12: memref<8x128xf32, #tpu.memory_space<vmem>>, %arg13: memref<8x128xf32, #tpu.memory_space<vmem>>) attributes {dimension_semantics = [#tpu.dimension_semantics<parallel>], iteration_bounds = array<i64: 1>, scalar_prefetch = 0 : i64, scratch_operands = 0 : i64, tpu.core_type = #tpu.core_type<tc>, window_params = [{transform_indices = @transform_0, window_bounds = array<i64: 8, 16>}, {pipeline_mode = #tpu.pipeline_mode<synchronous>, transform_indices = @transform_1, window_bounds = array<i64: 16, 128>}, {pipeline_mode = #tpu.pipeline_mode<synchronous>, transform_indices = @transform_2, window_bounds = array<i64: 1, 128>}, {pipeline_mode = #tpu.pipeline_mode<synchronous>, transform_indices = @transform_3, window_bounds = array<i64: 128, 128>}, {pipeline_mode = #tpu.pipeline_mode<synchronous>, transform_indices = @transform_4, window_bounds = array<i64: 1, 128>}, {pipeline_mode = #tpu.pipeline_mode<synchronous>, transform_indices = @transform_5, window_bounds = array<i64: 16, 128>}, {pipeline_mode = #tpu.pipeline_mode<synchronous>, transform_indices = @transform_6, window_bounds = array<i64: 1, 128>}, {pipeline_mode = #tpu.pipeline_mode<synchronous>, transform_indices = @transform_7, window_bounds = array<i64: 128, 128>}, {pipeline_mode = #tpu.pipeline_mode<synchronous>, transform_indices = @transform_8, window_bounds = array<i64: 1, 128>}, {pipeline_mode = #tpu.pipeline_mode<synchronous>, transform_indices = @transform_9, window_bounds = array<i64: 128, 128>}, {pipeline_mode = #tpu.pipeline_mode<synchronous>, transform_indices = @transform_10, window_bounds = array<i64: 1, 128>}, {transform_indices = @transform_11, window_bounds = array<i64: 8, 128>}, {transform_indices = @transform_12, window_bounds = array<i64: 8, 128>}]} {
    %c0 = arith.constant 0 : index
    %c0_0 = arith.constant 0 : index
    %0 = vector.load %arg1[%c0, %c0_0] : memref<8x16xf32, #tpu.memory_space<vmem>>, vector<8x16xf32>
    %c0_1 = arith.constant 0 : index
    %c0_2 = arith.constant 0 : index
    %1 = vector.load %arg2[%c0_1, %c0_2] : memref<16x128xf32, #tpu.memory_space<vmem>>, vector<16x128xf32>
    %cst = arith.constant dense<0.000000e+00> : vector<8x128xf32>
    %2 = tpu.matmul %0, %1, %cst {dimension_numbers = #tpu.dot_dimension_numbers<[1], [0], [0], [1], [0, 0, 1, 1], [], []>} : vector<8x16xf32>, vector<16x128xf32>, vector<8x128xf32> -> vector<8x128xf32>
    %c0_3 = arith.constant 0 : index
    %c0_4 = arith.constant 0 : index
    %3 = vector.load %arg3[%c0_3, %c0_4] : memref<1x128xf32, #tpu.memory_space<vmem>>, vector<1x128xf32>
    %4 = vector.broadcast %3 : vector<1x128xf32> to vector<8x128xf32>
    %5 = arith.addf %2, %4 : vector<8x128xf32>
    %6 = math.tanh %5 : vector<8x128xf32>
    %c0_5 = arith.constant 0 : index
    %c0_6 = arith.constant 0 : index
    %7 = vector.load %arg4[%c0_5, %c0_6] : memref<128x128xf32, #tpu.memory_space<vmem>>, vector<128x128xf32>
    %cst_7 = arith.constant dense<0.000000e+00> : vector<8x128xf32>
    %8 = tpu.matmul %6, %7, %cst_7 {dimension_numbers = #tpu.dot_dimension_numbers<[1], [0], [0], [1], [0, 0, 1, 1], [], []>} : vector<8x128xf32>, vector<128x128xf32>, vector<8x128xf32> -> vector<8x128xf32>
    %c0_8 = arith.constant 0 : index
    %c0_9 = arith.constant 0 : index
    %9 = vector.load %arg5[%c0_8, %c0_9] : memref<1x128xf32, #tpu.memory_space<vmem>>, vector<1x128xf32>
    %10 = vector.broadcast %9 : vector<1x128xf32> to vector<8x128xf32>
    %11 = arith.addf %8, %10 : vector<8x128xf32>
    %12 = math.tanh %11 : vector<8x128xf32>
    %c0_10 = arith.constant 0 : index
    %c0_11 = arith.constant 0 : index
    %13 = vector.load %arg6[%c0_10, %c0_11] : memref<16x128xf32, #tpu.memory_space<vmem>>, vector<16x128xf32>
    %cst_12 = arith.constant dense<0.000000e+00> : vector<8x128xf32>
    %14 = tpu.matmul %0, %13, %cst_12 {dimension_numbers = #tpu.dot_dimension_numbers<[1], [0], [0], [1], [0, 0, 1, 1], [], []>} : vector<8x16xf32>, vector<16x128xf32>, vector<8x128xf32> -> vector<8x128xf32>
    %c0_13 = arith.constant 0 : index
    %c0_14 = arith.constant 0 : index
    %15 = vector.load %arg7[%c0_13, %c0_14] : memref<1x128xf32, #tpu.memory_space<vmem>>, vector<1x128xf32>
    %16 = vector.broadcast %15 : vector<1x128xf32> to vector<8x128xf32>
    %17 = arith.addf %14, %16 : vector<8x128xf32>
    %18 = math.tanh %17 : vector<8x128xf32>
    %c0_15 = arith.constant 0 : index
    %c0_16 = arith.constant 0 : index
    %19 = vector.load %arg8[%c0_15, %c0_16] : memref<128x128xf32, #tpu.memory_space<vmem>>, vector<128x128xf32>
    %cst_17 = arith.constant dense<0.000000e+00> : vector<8x128xf32>
    %20 = tpu.matmul %18, %19, %cst_17 {dimension_numbers = #tpu.dot_dimension_numbers<[1], [0], [0], [1], [0, 0, 1, 1], [], []>} : vector<8x128xf32>, vector<128x128xf32>, vector<8x128xf32> -> vector<8x128xf32>
    %c0_18 = arith.constant 0 : index
    %c0_19 = arith.constant 0 : index
    %21 = vector.load %arg9[%c0_18, %c0_19] : memref<1x128xf32, #tpu.memory_space<vmem>>, vector<1x128xf32>
    %22 = vector.broadcast %21 : vector<1x128xf32> to vector<8x128xf32>
    %23 = arith.addf %20, %22 : vector<8x128xf32>
    %24 = math.tanh %23 : vector<8x128xf32>
    %c0_20 = arith.constant 0 : index
    %c0_21 = arith.constant 0 : index
    %25 = vector.load %arg10[%c0_20, %c0_21] : memref<128x128xf32, #tpu.memory_space<vmem>>, vector<128x128xf32>
    %cst_22 = arith.constant dense<0.000000e+00> : vector<8x128xf32>
    %26 = tpu.matmul %12, %25, %cst_22 {dimension_numbers = #tpu.dot_dimension_numbers<[1], [0], [0], [1], [0, 0, 1, 1], [], []>} : vector<8x128xf32>, vector<128x128xf32>, vector<8x128xf32> -> vector<8x128xf32>
    %c0_23 = arith.constant 0 : index
    %c0_24 = arith.constant 0 : index
    %27 = vector.load %arg11[%c0_23, %c0_24] : memref<1x128xf32, #tpu.memory_space<vmem>>, vector<1x128xf32>
    %28 = vector.broadcast %27 : vector<1x128xf32> to vector<8x128xf32>
    %29 = arith.addf %26, %28 : vector<8x128xf32>
    %c0_25 = arith.constant 0 : index
    %c0_26 = arith.constant 0 : index
    %30 = vector.load %arg12[%c0_25, %c0_26] : memref<8x128xf32, #tpu.memory_space<vmem>>, vector<8x128xf32>
    tpu.vector_store %arg12[%c0_25, %c0_26], %29 {strides = array<i32>} : memref<8x128xf32, #tpu.memory_space<vmem>>, vector<8x128xf32>,
    %c0_27 = arith.constant 0 : index
    %c0_28 = arith.constant 0 : index
    %31 = vector.load %arg13[%c0_27, %c0_28] : memref<8x128xf32, #tpu.memory_space<vmem>>, vector<8x128xf32>
    tpu.vector_store %arg13[%c0_27, %c0_28], %24 {strides = array<i32>} : memref<8x128xf32, #tpu.memory_space<vmem>>, vector<8x128xf32>,
    return
  }
  func.func @transform_0(%arg0: i32) -> (i32, i32) {
    %c0_i32 = arith.constant 0 : i32
    %c0_i32_0 = arith.constant 0 : i32
    return %arg0, %c0_i32 : i32, i32
  }
  func.func @transform_1(%arg0: i32) -> (i32, i32) {
    %c0_i32 = arith.constant 0 : i32
    %c0_i32_0 = arith.constant 0 : i32
    %c0_i32_1 = arith.constant 0 : i32
    return %c0_i32, %c0_i32_0 : i32, i32
  }
  func.func @transform_2(%arg0: i32) -> (i32, i32) {
    %c0_i32 = arith.constant 0 : i32
    %c0_i32_0 = arith.constant 0 : i32
    %c0_i32_1 = arith.constant 0 : i32
    return %c0_i32, %c0_i32_0 : i32, i32
  }
  func.func @transform_3(%arg0: i32) -> (i32, i32) {
    %c0_i32 = arith.constant 0 : i32
    %c0_i32_0 = arith.constant 0 : i32
    %c0_i32_1 = arith.constant 0 : i32
    return %c0_i32, %c0_i32_0 : i32, i32
  }
  func.func @transform_4(%arg0: i32) -> (i32, i32) {
    %c0_i32 = arith.constant 0 : i32
    %c0_i32_0 = arith.constant 0 : i32
    %c0_i32_1 = arith.constant 0 : i32
    return %c0_i32, %c0_i32_0 : i32, i32
  }
  func.func @transform_5(%arg0: i32) -> (i32, i32) {
    %c0_i32 = arith.constant 0 : i32
    %c0_i32_0 = arith.constant 0 : i32
    %c0_i32_1 = arith.constant 0 : i32
    return %c0_i32, %c0_i32_0 : i32, i32
  }
  func.func @transform_6(%arg0: i32) -> (i32, i32) {
    %c0_i32 = arith.constant 0 : i32
    %c0_i32_0 = arith.constant 0 : i32
    %c0_i32_1 = arith.constant 0 : i32
    return %c0_i32, %c0_i32_0 : i32, i32
  }
  func.func @transform_7(%arg0: i32) -> (i32, i32) {
    %c0_i32 = arith.constant 0 : i32
    %c0_i32_0 = arith.constant 0 : i32
    %c0_i32_1 = arith.constant 0 : i32
    return %c0_i32, %c0_i32_0 : i32, i32
  }
  func.func @transform_8(%arg0: i32) -> (i32, i32) {
    %c0_i32 = arith.constant 0 : i32
    %c0_i32_0 = arith.constant 0 : i32
    %c0_i32_1 = arith.constant 0 : i32
    return %c0_i32, %c0_i32_0 : i32, i32
  }
  func.func @transform_9(%arg0: i32) -> (i32, i32) {
    %c0_i32 = arith.constant 0 : i32
    %c0_i32_0 = arith.constant 0 : i32
    %c0_i32_1 = arith.constant 0 : i32
    return %c0_i32, %c0_i32_0 : i32, i32
  }
  func.func @transform_10(%arg0: i32) -> (i32, i32) {
    %c0_i32 = arith.constant 0 : i32
    %c0_i32_0 = arith.constant 0 : i32
    %c0_i32_1 = arith.constant 0 : i32
    return %c0_i32, %c0_i32_0 : i32, i32
  }
  func.func @transform_11(%arg0: i32) -> (i32, i32) {
    %c0_i32 = arith.constant 0 : i32
    %c0_i32_0 = arith.constant 0 : i32
    return %arg0, %c0_i32 : i32, i32
  }
  func.func @transform_12(%arg0: i32) -> (i32, i32) {
    %c0_i32 = arith.constant 0 : i32
    %c0_i32_0 = arith.constant 0 : i32
    return %arg0, %c0_i32 : i32, i32
  }
}

</mosaic_0001>

<llo_original>
// kernel: mlp_base_forward.1
$region0: #{mlp_base_forward.1}
  #allocation0 [shape = 'u32[]', space=smem, size = 0x4, offset = 0x4, fixed_abs, tag = 'smem constant byte address 0x4 - core index']
  #allocation1 [shape = 'u32[144,128]{1,0:T(1,128)}', space=vmem, size = 0x12000, scoped, tag = 'internal scratch']
  %s0 = inlined_call_operand.vmem [shape: f32[8,16], index: 0, kind: input, shape index: {}]
  %s1 = inlined_call_operand.vmem [shape: f32[16,128], index: 1, kind: input, shape index: {}]
  %s2 = inlined_call_operand.vmem [shape: f32[1,128], index: 2, kind: input, shape index: {}]
  %s3 = inlined_call_operand.hbm [shape: f32[128,128], index: 3, kind: input, shape index: {}]
  %s4 = inlined_call_operand.vmem [shape: f32[1,128], index: 4, kind: input, shape index: {}]
  %s5 = inlined_call_operand.hbm [shape: f32[16,128], index: 5, kind: input, shape index: {}]
  %s6 = inlined_call_operand.vmem [shape: f32[1,128], index: 6, kind: input, shape index: {}]
  %s7 = inlined_call_operand.hbm [shape: f32[128,128], index: 7, kind: input, shape index: {}]
  %s8 = inlined_call_operand.vmem [shape: f32[1,128], index: 8, kind: input, shape index: {}]
  %s9 = inlined_call_operand.hbm [shape: f32[128,128], index: 9, kind: input, shape index: {}]
  %s10 = inlined_call_operand.hbm [shape: f32[1,128], index: 10, kind: input, shape index: {}]
  %s11 = inlined_call_operand.vmem [shape: f32[8,128], index: 11, kind: output, shape index: {0}]
  %s12 = inlined_call_operand.vmem [shape: f32[8,128], index: 12, kind: output, shape index: {1}]
  %13 = xla_tuple %s11, %s12
  %s14 = sld [smem:[#allocation0]]
  $region82: #{mlp_base_forward.1} parent=0
    _
  %s16 = ssub.s32 1, %s14
  %s17 = scalar_select 0, %s16, %s14
  $region1: #{mlp_base_forward.1} parent=0
    #allocation2 [shape = 'u8[65536]{0}', space=vmem, size = 0x10000, scoped, tag = 'input window, operand 3, single buffered']
    #allocation3 [shape = 's32[1]{0}', space=sflag, size = 0x4, scoped, tag = 'scoped memory for mlp_base_forward.1']
    #allocation4 [shape = 'u8[8192]{0}', space=vmem, size = 0x2000, scoped, tag = 'input window, operand 5, single buffered']
    #allocation5 [shape = 's32[1]{0}', space=sflag, size = 0x4, scoped, tag = 'scoped memory for mlp_base_forward.1']
    #allocation6 [shape = 'u8[65536]{0}', space=vmem, size = 0x10000, scoped, tag = 'input window, operand 7, single buffered']
    #allocation7 [shape = 'u8[65536]{0}', space=vmem, size = 0x10000, scoped, tag = 'input window, operand 9, single buffered']
    #allocation8 [shape = 's32[1]{0}', space=sflag, size = 0x4, scoped, tag = 'scoped memory for mlp_base_forward.1']
    #allocation9 [shape = 'u8[512]{0}', space=vmem, size = 0x400, scoped, tag = 'input window, operand 10, single buffered']
    %18 = vsyncpa [#allocation3], 0
    %19 = vsyncpa [#allocation5], 0
    %20 = vsyncpa [#allocation8], 0
    // Predicated region
    $region2: #{mlp_base_forward.1} parent=1 // pred_check
      _
    $region3: #{mlp_base_forward.1} parent=1 // pred_check_branch
      %22 = sbr.rel (0) target = $region5
    $region4: #{mlp_base_forward.1} parent=1 // pred_region
      _
    $region5: #{mlp_base_forward.1} parent=1 // pred_fallthru
      _
    // Predicated region
    $region6: #{mlp_base_forward.1} parent=1 // pred_check
      _
    $region7: #{mlp_base_forward.1} parent=1 // pred_check_branch
      %24 = sbr.rel (0) target = $region9
    $region8: #{mlp_base_forward.1} parent=1 // pred_region
      _
    $region9: #{mlp_base_forward.1} parent=1 // pred_fallthru
      _
    // Predicated region
    $region10: #{mlp_base_forward.1} parent=1 // pred_check
      _
    $region11: #{mlp_base_forward.1} parent=1 // pred_check_branch
      %26 = sbr.rel (0) target = $region13
    $region12: #{mlp_base_forward.1} parent=1 // pred_region
      _
    $region13: #{mlp_base_forward.1} parent=1 // pred_fallthru
      _
    // Predicated region
    $region14: #{mlp_base_forward.1} parent=1 // pred_check
      _
    $region15: #{mlp_base_forward.1} parent=1 // pred_check_branch
      %28 = sbr.rel (0) target = $region17
    $region16: #{mlp_base_forward.1} parent=1 // pred_region
      %s30 = ssub.s32 2048, 2048
      %31 = vsyncadd [#allocation3], %s30
      %s32 = sshll.u32 [#allocation2], 4
      %s33 = int_to_ptr.vmem [resolvable:$true] %s32
      %38 = dma.hbm_to_vmem [thread:$0]  %s3, 2048, %s33, [#allocation3], 128, 128, 8
    $region17: #{mlp_base_forward.1} parent=1 // pred_fallthru
      _
    // Predicated region
    $region18: #{mlp_base_forward.1} parent=1 // pred_check
      _
    $region19: #{mlp_base_forward.1} parent=1 // pred_check_branch
      %40 = sbr.rel (0) target = $region21
    $region20: #{mlp_base_forward.1} parent=1 // pred_region
      _
    $region21: #{mlp_base_forward.1} parent=1 // pred_fallthru
      _
    // Predicated region
    $region22: #{mlp_base_forward.1} parent=1 // pred_check
      _
    $region23: #{mlp_base_forward.1} parent=1 // pred_check_branch
      %42 = sbr.rel (0) target = $region25
    $region24: #{mlp_base_forward.1} parent=1 // pred_region
      %s44 = ssub.s32 256, 256
      %45 = vsyncadd [#allocation5], %s44
      %s46 = sshll.u32 [#allocation4], 4
      %s47 = int_to_ptr.vmem [resolvable:$true] %s46
      %52 = dma.hbm_to_vmem [thread:$0]  %s5, 256, %s47, [#allocation5], 128, 128, 8
    $region25: #{mlp_base_forward.1} parent=1 // pred_fallthru
      _
    // Predicated region
    $region26: #{mlp_base_forward.1} parent=1 // pred_check
      _
    $region27: #{mlp_base_forward.1} parent=1 // pred_check_branch
      %54 = sbr.rel (0) target = $region29
    $region28: #{mlp_base_forward.1} parent=1 // pred_region
      _
    $region29: #{mlp_base_forward.1} parent=1 // pred_fallthru
      _
    // Predicated region
    $region30: #{mlp_base_forward.1} parent=1 // pred_check
      _
    $region31: #{mlp_base_forward.1} parent=1 // pred_check_branch
      %56 = sbr.rel (0) target = $region33
    $region32: #{mlp_base_forward.1} parent=1 // pred_region
      %s58 = ssub.s32 2048, 2048
      %59 = vsyncadd [#allocation5], %s58
      %s60 = sshll.u32 [#allocation6], 4
      %s61 = int_to_ptr.vmem [resolvable:$true] %s60
      %66 = dma.hbm_to_vmem [thread:$0]  %s7, 2048, %s61, [#allocation5], 128, 128, 8
    $region33: #{mlp_base_forward.1} parent=1 // pred_fallthru
      _
    // Predicated region
    $region34: #{mlp_base_forward.1} parent=1 // pred_check
      _
    $region35: #{mlp_base_forward.1} parent=1 // pred_check_branch
      %68 = sbr.rel (0) target = $region37
    $region36: #{mlp_base_forward.1} parent=1 // pred_region
      _
    $region37: #{mlp_base_forward.1} parent=1 // pred_fallthru
      _
    // Predicated region
    $region38: #{mlp_base_forward.1} parent=1 // pred_check
      _
    $region39: #{mlp_base_forward.1} parent=1 // pred_check_branch
      %70 = sbr.rel (0) target = $region41
    $region40: #{mlp_base_forward.1} parent=1 // pred_region
      %s72 = ssub.s32 2048, 2048
      %73 = vsyncadd [#allocation8], %s72
      %s74 = sshll.u32 [#allocation7], 4
      %s75 = int_to_ptr.vmem [resolvable:$true] %s74
      %80 = dma.hbm_to_vmem [thread:$0]  %s9, 2048, %s75, [#allocation8], 128, 128, 8
    $region41: #{mlp_base_forward.1} parent=1 // pred_fallthru
      _
    // Predicated region
    $region42: #{mlp_base_forward.1} parent=1 // pred_check
      _
    $region43: #{mlp_base_forward.1} parent=1 // pred_check_branch
      %82 = sbr.rel (0) target = $region45
    $region44: #{mlp_base_forward.1} parent=1 // pred_region
      %s84 = ssub.s32 16, 16
      %85 = vsyncadd [#allocation8], %s84
      %s87 = sshll.u32 [#allocation9], 4
      %s88 = int_to_ptr.vmem [resolvable:$true] %s87
      %90 = dma.hbm_to_vmem [thread:$0]  %s10, 16, %s88, [#allocation8]
    $region45: #{mlp_base_forward.1} parent=1 // pred_fallthru
      _
    // Predicated region
    $region46: #{mlp_base_forward.1} parent=1 // pred_check
      _
    $region47: #{mlp_base_forward.1} parent=1 // pred_check_branch
      %92 = sbr.rel (0) target = $region49
    $region48: #{mlp_base_forward.1} parent=1 // pred_region
      %93 = dma.done [#allocation3], 2048
    $region49: #{mlp_base_forward.1} parent=1 // pred_fallthru
      _
    // Predicated region
    $region50: #{mlp_base_forward.1} parent=1 // pred_check
      _
    $region51: #{mlp_base_forward.1} parent=1 // pred_check_branch
      %95 = sbr.rel (0) target = $region53
    $region52: #{mlp_base_forward.1} parent=1 // pred_region
      %96 = dma.done [#allocation5], 256
    $region53: #{mlp_base_forward.1} parent=1 // pred_fallthru
      _
    // Predicated region
    $region54: #{mlp_base_forward.1} parent=1 // pred_check
      _
    $region55: #{mlp_base_forward.1} parent=1 // pred_check_branch
      %98 = sbr.rel (0) target = $region57
    $region56: #{mlp_base_forward.1} parent=1 // pred_region
      %99 = dma.done [#allocation5], 2048
    $region57: #{mlp_base_forward.1} parent=1 // pred_fallthru
      _
    // Predicated region
    $region58: #{mlp_base_forward.1} parent=1 // pred_check
      _
    $region59: #{mlp_base_forward.1} parent=1 // pred_check_branch
      %101 = sbr.rel (0) target = $region61
    $region60: #{mlp_base_forward.1} parent=1 // pred_region
      %102 = dma.done [#allocation8], 2048
    $region61: #{mlp_base_forward.1} parent=1 // pred_fallthru
      _
    // Predicated region
    $region62: #{mlp_base_forward.1} parent=1 // pred_check
      _
    $region63: #{mlp_base_forward.1} parent=1 // pred_check_branch
      %104 = sbr.rel (0) target = $region65
    $region64: #{mlp_base_forward.1} parent=1 // pred_region
      %105 = dma.done [#allocation8], 16
    $region65: #{mlp_base_forward.1} parent=1 // pred_fallthru
      _
    %v106 = vld [vmem:[%s0] sm:$0xff]
    %v107 = vld [vmem:[%s1] sm:$0xff]
    %v108 = vld [vmem:[%s1 + $0x8] sm:$0xff]
    %v109 = vld [vmem:[%s2] sm:$0x1]
    %v111 = vlaneseq
    %v112 = vshrl.u32 %v111, 7
    %v113 = vsub.s32 0, %v112
    %v114 = vrot.slane %v109, %v113
    %vm116 = vcmask 130048
    %v118 = vsel %vm116, %v106, 0
    %120 = vmatprep.subr.mxu0 0.0
    %121 = vmatpush1.msra.mxu0 0.0
    %122 = vmatprep.subr.mxu0 0.0
    %123 = vmatpush1.msra.mxu0 0.0
    %124 = vmatprep.subr.mxu0 0.0
    %125 = vmatpush1.msra.mxu0 0.0
    %126 = vmatprep.subr.mxu0 0.0
    %127 = vmatpush1.msra.mxu0 0.0
    %128 = vmatprep.subr.mxu0 0.0
    %129 = vmatpush1.msra.mxu0 0.0
    %130 = vmatprep.subr.mxu0 0.0
    %131 = vmatpush1.msra.mxu0 0.0
    %132 = vmatprep.subr.mxu0 0.0
    %133 = vmatpush1.msra.mxu0 0.0
    %134 = vmatprep.subr.mxu0 0.0
    %135 = vmatpush1.msra.mxu0 0.0
    %136 = vmatprep.subr.mxu0 0.0
    %137 = vmatpush1.msra.mxu0 0.0
    %138 = vmatprep.subr.mxu0 0.0
    %139 = vmatpush1.msra.mxu0 0.0
    %140 = vmatprep.subr.mxu0 0.0
    %141 = vmatpush1.msra.mxu0 0.0
    %142 = vmatprep.subr.mxu0 0.0
    %143 = vmatpush1.msra.mxu0 0.0
    %144 = vmatprep.subr.mxu0 0.0
    %145 = vmatpush1.msra.mxu0 0.0
    %146 = vmatprep.subr.mxu0 0.0
    %147 = vmatpush1.msra.mxu0 0.0
    %148 = vmatprep.subr.mxu0 0.0
    %149 = vmatpush1.msra.mxu0 %v108
    %150 = vmatprep.subr.mxu0 0.0
    %151 = vmatpush1.msra.mxu0 %v107
    %152 = vmatprep.subr.mxu0 0.0
    %153 = vmatpush2.msra.mxu0 0.0
    %154 = vmatprep.subr.mxu0 0.0
    %155 = vmatpush2.msra.mxu0 0.0
    %156 = vmatprep.subr.mxu0 0.0
    %157 = vmatpush2.msra.mxu0 0.0
    %158 = vmatprep.subr.mxu0 0.0
    %159 = vmatpush2.msra.mxu0 0.0
    %160 = vmatprep.subr.mxu0 0.0
    %161 = vmatpush2.msra.mxu0 0.0
    %162 = vmatprep.subr.mxu0 0.0
    %163 = vmatpush2.msra.mxu0 0.0
    %164 = vmatprep.subr.mxu0 0.0
    %165 = vmatpush2.msra.mxu0 0.0
    %166 = vmatprep.subr.mxu0 0.0
    %167 = vmatpush2.msra.mxu0 0.0
    %168 = vmatprep.subr.mxu0 0.0
    %169 = vmatpush2.msra.mxu0 0.0
    %170 = vmatprep.subr.mxu0 0.0
    %171 = vmatpush2.msra.mxu0 0.0
    %172 = vmatprep.subr.mxu0 0.0
    %173 = vmatpush2.msra.mxu0 0.0
    %174 = vmatprep.subr.mxu0 0.0
    %175 = vmatpush2.msra.mxu0 0.0
    %176 = vmatprep.subr.mxu0 0.0
    %177 = vmatpush2.msra.mxu0 0.0
    %178 = vmatprep.subr.mxu0 0.0
    %179 = vmatpush2.msra.mxu0 0.0
    %180 = vmatprep.subr.mxu0 0.0
    %181 = vmatpush2.msra.mxu0 0.0
    %182 = vmatprep.subr.mxu0 0.0
    %183 = vmatpush2.msra.mxu0 0.0
    %184 = vmatprep.mubr.f32.mxu0 0.0
    %185 = vmatmul.mubr.f32.gmra.mxu0 %v118
    %v186 = vpop.f32.mrf.mxu0
    %v187 = vadd.f32 %v114, %v186
    %v188 = vpop.f32.mrf.mxu0
    %189 = vdwg.mxu0
    %v190 = vtanh.pop %v187
    %v191 = vld [vmem:[#allocation2] sm:$0xff]
    %v192 = vld [vmem:[#allocation2 + $0x8] sm:$0xff]
    %v193 = vld [vmem:[#allocation2 + $0x10] sm:$0xff]
    %v194 = vld [vmem:[#allocation2 + $0x18] sm:$0xff]
    %v195 = vld [vmem:[#allocation2 + $0x20] sm:$0xff]
    %v196 = vld [vmem:[#allocation2 + $0x28] sm:$0xff]
    %v197 = vld [vmem:[#allocation2 + $0x30] sm:$0xff]
    %v198 = vld [vmem:[#allocation2 + $0x38] sm:$0xff]
    %v199 = vld [vmem:[#allocation2 + $0x40] sm:$0xff]
    %v200 = vld [vmem:[#allocation2 + $0x48] sm:$0xff]
    %v201 = vld [vmem:[#allocation2 + $0x50] sm:$0xff]
    %v202 = vld [vmem:[#allocation2 + $0x58] sm:$0xff]
    %v203 = vld [vmem:[#allocation2 + $0x60] sm:$0xff]
    %v204 = vld [vmem:[#allocation2 + $0x68] sm:$0xff]
    %v205 = vld [vmem:[#allocation2 + $0x70] sm:$0xff]
    %v206 = vld [vmem:[#allocation2 + $0x78] sm:$0xff]
    %v207 = vld [vmem:[%s4] sm:$0x1]
    %v209 = vlaneseq
    %v210 = vshrl.u32 %v209, 7
    %v211 = vsub.s32 0, %v210
    %v212 = vrot.slane %v207, %v211
    %214 = vmatprep.subr.mxu0 0.0
    %215 = vmatpush1.msra.mxu0 %v206
    %216 = vmatprep.subr.mxu0 0.0
    %217 = vmatpush1.msra.mxu0 %v205
    %218 = vmatprep.subr.mxu0 0.0
    %219 = vmatpush1.msra.mxu0 %v204
    %220 = vmatprep.subr.mxu0 0.0
    %221 = vmatpush1.msra.mxu0 %v203
    %222 = vmatprep.subr.mxu0 0.0
    %223 = vmatpush1.msra.mxu0 %v202
    %224 = vmatprep.subr.mxu0 0.0
    %225 = vmatpush1.msra.mxu0 %v201
    %226 = vmatprep.subr.mxu0 0.0
    %227 = vmatpush1.msra.mxu0 %v200
    %228 = vmatprep.subr.mxu0 0.0
    %229 = vmatpush1.msra.mxu0 %v199
    %230 = vmatprep.subr.mxu0 0.0
    %231 = vmatpush1.msra.mxu0 %v198
    %232 = vmatprep.subr.mxu0 0.0
    %233 = vmatpush1.msra.mxu0 %v197
    %234 = vmatprep.subr.mxu0 0.0
    %235 = vmatpush1.msra.mxu0 %v196
    %236 = vmatprep.subr.mxu0 0.0
    %237 = vmatpush1.msra.mxu0 %v195
    %238 = vmatprep.subr.mxu0 0.0
    %239 = vmatpush1.msra.mxu0 %v194
    %240 = vmatprep.subr.mxu0 0.0
    %241 = vmatpush1.msra.mxu0 %v193
    %242 = vmatprep.subr.mxu0 0.0
    %243 = vmatpush1.msra.mxu0 %v192
    %244 = vmatprep.subr.mxu0 0.0
    %245 = vmatpush1.msra.mxu0 %v191
    %246 = vmatprep.subr.mxu0 0.0
    %247 = vmatpush2.msra.mxu0 0.0
    %248 = vmatprep.subr.mxu0 0.0
    %249 = vmatpush2.msra.mxu0 0.0
    %250 = vmatprep.subr.mxu0 0.0
    %251 = vmatpush2.msra.mxu0 0.0
    %252 = vmatprep.subr.mxu0 0.0
    %253 = vmatpush2.msra.mxu0 0.0
    %254 = vmatprep.subr.mxu0 0.0
    %255 = vmatpush2.msra.mxu0 0.0
    %256 = vmatprep.subr.mxu0 0.0
    %257 = vmatpush2.msra.mxu0 0.0
    %258 = vmatprep.subr.mxu0 0.0
    %259 = vmatpush2.msra.mxu0 0.0
    %260 = vmatprep.subr.mxu0 0.0
    %261 = vmatpush2.msra.mxu0 0.0
    %262 = vmatprep.subr.mxu0 0.0
    %263 = vmatpush2.msra.mxu0 0.0
    %264 = vmatprep.subr.mxu0 0.0
    %265 = vmatpush2.msra.mxu0 0.0
    %266 = vmatprep.subr.mxu0 0.0
    %267 = vmatpush2.msra.mxu0 0.0
    %268 = vmatprep.subr.mxu0 0.0
    %269 = vmatpush2.msra.mxu0 0.0
    %270 = vmatprep.subr.mxu0 0.0
    %271 = vmatpush2.msra.mxu0 0.0
    %272 = vmatprep.subr.mxu0 0.0
    %273 = vmatpush2.msra.mxu0 0.0
    %274 = vmatprep.subr.mxu0 0.0
    %275 = vmatpush2.msra.mxu0 0.0
    %276 = vmatprep.subr.mxu0 0.0
    %277 = vmatpush2.msra.mxu0 0.0
    %278 = vmatprep.mubr.f32.mxu0 0.0
    %279 = vmatmul.mubr.f32.gmra.mxu0 %v190
    %v280 = vpop.f32.mrf.mxu0
    %v281 = vadd.f32 %v212, %v280
    %v282 = vpop.f32.mrf.mxu0
    %283 = vdwg.mxu0
    %v284 = vtanh.pop %v281
    %v285 = vld [vmem:[#allocation4] sm:$0xff]
    %v286 = vld [vmem:[#allocation4 + $0x8] sm:$0xff]
    %v287 = vld [vmem:[%s6] sm:$0x1]
    %v289 = vlaneseq
    %v290 = vshrl.u32 %v289, 7
    %v291 = vsub.s32 0, %v290
    %v292 = vrot.slane %v287, %v291
    %294 = vmatprep.subr.mxu0 0.0
    %295 = vmatpush1.msra.mxu0 0.0
    %296 = vmatprep.subr.mxu0 0.0
    %297 = vmatpush1.msra.mxu0 0.0
    %298 = vmatprep.subr.mxu0 0.0
    %299 = vmatpush1.msra.mxu0 0.0
    %300 = vmatprep.subr.mxu0 0.0
    %301 = vmatpush1.msra.mxu0 0.0
    %302 = vmatprep.subr.mxu0 0.0
    %303 = vmatpush1.msra.mxu0 0.0
    %304 = vmatprep.subr.mxu0 0.0
    %305 = vmatpush1.msra.mxu0 0.0
    %306 = vmatprep.subr.mxu0 0.0
    %307 = vmatpush1.msra.mxu0 0.0
    %308 = vmatprep.subr.mxu0 0.0
    %309 = vmatpush1.msra.mxu0 0.0
    %310 = vmatprep.subr.mxu0 0.0
    %311 = vmatpush1.msra.mxu0 0.0
    %312 = vmatprep.subr.mxu0 0.0
    %313 = vmatpush1.msra.mxu0 0.0
    %314 = vmatprep.subr.mxu0 0.0
    %315 = vmatpush1.msra.mxu0 0.0
    %316 = vmatprep.subr.mxu0 0.0
    %317 = vmatpush1.msra.mxu0 0.0
    %318 = vmatprep.subr.mxu0 0.0
    %319 = vmatpush1.msra.mxu0 0.0
    %320 = vmatprep.subr.mxu0 0.0
    %321 = vmatpush1.msra.mxu0 0.0
    %322 = vmatprep.subr.mxu0 0.0
    %323 = vmatpush1.msra.mxu0 %v286
    %324 = vmatprep.subr.mxu0 0.0
    %325 = vmatpush1.msra.mxu0 %v285
    %326 = vmatprep.subr.mxu0 0.0
    %327 = vmatpush2.msra.mxu0 0.0
    %328 = vmatprep.subr.mxu0 0.0
    %329 = vmatpush2.msra.mxu0 0.0
    %330 = vmatprep.subr.mxu0 0.0
    %331 = vmatpush2.msra.mxu0 0.0
    %332 = vmatprep.subr.mxu0 0.0
    %333 = vmatpush2.msra.mxu0 0.0
    %334 = vmatprep.subr.mxu0 0.0
    %335 = vmatpush2.msra.mxu0 0.0
    %336 = vmatprep.subr.mxu0 0.0
    %337 = vmatpush2.msra.mxu0 0.0
    %338 = vmatprep.subr.mxu0 0.0
    %339 = vmatpush2.msra.mxu0 0.0
    %340 = vmatprep.subr.mxu0 0.0
    %341 = vmatpush2.msra.mxu0 0.0
    %342 = vmatprep.subr.mxu0 0.0
    %343 = vmatpush2.msra.mxu0 0.0
    %344 = vmatprep.subr.mxu0 0.0
    %345 = vmatpush2.msra.mxu0 0.0
    %346 = vmatprep.subr.mxu0 0.0
    %347 = vmatpush2.msra.mxu0 0.0
    %348 = vmatprep.subr.mxu0 0.0
    %349 = vmatpush2.msra.mxu0 0.0
    %350 = vmatprep.subr.mxu0 0.0
    %351 = vmatpush2.msra.mxu0 0.0
    %352 = vmatprep.subr.mxu0 0.0
    %353 = vmatpush2.msra.mxu0 0.0
    %354 = vmatprep.subr.mxu0 0.0
    %355 = vmatpush2.msra.mxu0 0.0
    %356 = vmatprep.subr.mxu0 0.0
    %357 = vmatpush2.msra.mxu0 0.0
    %358 = vmatprep.mubr.f32.mxu0 0.0
    %359 = vmatmul.mubr.f32.gmra.mxu0 %v118
    %v360 = vpop.f32.mrf.mxu0
    %v361 = vadd.f32 %v292, %v360
    %v362 = vpop.f32.mrf.mxu0
    %363 = vdwg.mxu0
    %v364 = vtanh.pop %v361
    %v365 = vld [vmem:[#allocation6] sm:$0xff]
    %v366 = vld [vmem:[#allocation6 + $0x8] sm:$0xff]
    %v367 = vld [vmem:[#allocation6 + $0x10] sm:$0xff]
    %v368 = vld [vmem:[#allocation6 + $0x18] sm:$0xff]
    %v369 = vld [vmem:[#allocation6 + $0x20] sm:$0xff]
    %v370 = vld [vmem:[#allocation6 + $0x28] sm:$0xff]
    %v371 = vld [vmem:[#allocation6 + $0x30] sm:$0xff]
    %v372 = vld [vmem:[#allocation6 + $0x38] sm:$0xff]
    %v373 = vld [vmem:[#allocation6 + $0x40] sm:$0xff]
    %v374 = vld [vmem:[#allocation6 + $0x48] sm:$0xff]
    %v375 = vld [vmem:[#allocation6 + $0x50] sm:$0xff]
    %v376 = vld [vmem:[#allocation6 + $0x58] sm:$0xff]
    %v377 = vld [vmem:[#allocation6 + $0x60] sm:$0xff]
    %v378 = vld [vmem:[#allocation6 + $0x68] sm:$0xff]
    %v379 = vld [vmem:[#allocation6 + $0x70] sm:$0xff]
    %v380 = vld [vmem:[#allocation6 + $0x78] sm:$0xff]
    %v381 = vld [vmem:[%s8] sm:$0x1]
    %v383 = vlaneseq
    %v384 = vshrl.u32 %v383, 7
    %v385 = vsub.s32 0, %v384
    %v386 = vrot.slane %v381, %v385
    %388 = vmatprep.subr.mxu0 0.0
    %389 = vmatpush1.msra.mxu0 %v380
    %390 = vmatprep.subr.mxu0 0.0
    %391 = vmatpush1.msra.mxu0 %v379
    %392 = vmatprep.subr.mxu0 0.0
    %393 = vmatpush1.msra.mxu0 %v378
    %394 = vmatprep.subr.mxu0 0.0
    %395 = vmatpush1.msra.mxu0 %v377
    %396 = vmatprep.subr.mxu0 0.0
    %397 = vmatpush1.msra.mxu0 %v376
    %398 = vmatprep.subr.mxu0 0.0
    %399 = vmatpush1.msra.mxu0 %v375
    %400 = vmatprep.subr.mxu0 0.0
    %401 = vmatpush1.msra.mxu0 %v374
    %402 = vmatprep.subr.mxu0 0.0
    %403 = vmatpush1.msra.mxu0 %v373
    %404 = vmatprep.subr.mxu0 0.0
    %405 = vmatpush1.msra.mxu0 %v372
    %406 = vmatprep.subr.mxu0 0.0
    %407 = vmatpush1.msra.mxu0 %v371
    %408 = vmatprep.subr.mxu0 0.0
    %409 = vmatpush1.msra.mxu0 %v370
    %410 = vmatprep.subr.mxu0 0.0
    %411 = vmatpush1.msra.mxu0 %v369
    %412 = vmatprep.subr.mxu0 0.0
    %413 = vmatpush1.msra.mxu0 %v368
    %414 = vmatprep.subr.mxu0 0.0
    %415 = vmatpush1.msra.mxu0 %v367
    %416 = vmatprep.subr.mxu0 0.0
    %417 = vmatpush1.msra.mxu0 %v366
    %418 = vmatprep.subr.mxu0 0.0
    %419 = vmatpush1.msra.mxu0 %v365
    %420 = vmatprep.subr.mxu0 0.0
    %421 = vmatpush2.msra.mxu0 0.0
    %422 = vmatprep.subr.mxu0 0.0
    %423 = vmatpush2.msra.mxu0 0.0
    %424 = vmatprep.subr.mxu0 0.0
    %425 = vmatpush2.msra.mxu0 0.0
    %426 = vmatprep.subr.mxu0 0.0
    %427 = vmatpush2.msra.mxu0 0.0
    %428 = vmatprep.subr.mxu0 0.0
    %429 = vmatpush2.msra.mxu0 0.0
    %430 = vmatprep.subr.mxu0 0.0
    %431 = vmatpush2.msra.mxu0 0.0
    %432 = vmatprep.subr.mxu0 0.0
    %433 = vmatpush2.msra.mxu0 0.0
    %434 = vmatprep.subr.mxu0 0.0
    %435 = vmatpush2.msra.mxu0 0.0
    %436 = vmatprep.subr.mxu0 0.0
    %437 = vmatpush2.msra.mxu0 0.0
    %438 = vmatprep.subr.mxu0 0.0
    %439 = vmatpush2.msra.mxu0 0.0
    %440 = vmatprep.subr.mxu0 0.0
    %441 = vmatpush2.msra.mxu0 0.0
    %442 = vmatprep.subr.mxu0 0.0
    %443 = vmatpush2.msra.mxu0 0.0
    %444 = vmatprep.subr.mxu0 0.0
    %445 = vmatpush2.msra.mxu0 0.0
    %446 = vmatprep.subr.mxu0 0.0
    %447 = vmatpush2.msra.mxu0 0.0
    %448 = vmatprep.subr.mxu0 0.0
    %449 = vmatpush2.msra.mxu0 0.0
    %450 = vmatprep.subr.mxu0 0.0
    %451 = vmatpush2.msra.mxu0 0.0
    %452 = vmatprep.mubr.f32.mxu0 0.0
    %453 = vmatmul.mubr.f32.gmra.mxu0 %v364
    %v454 = vpop.f32.mrf.mxu0
    %v455 = vadd.f32 %v386, %v454
    %v456 = vpop.f32.mrf.mxu0
    %457 = vdwg.mxu0
    %v458 = vtanh.pop %v455
    %v459 = vld [vmem:[#allocation7] sm:$0xff]
    %v460 = vld [vmem:[#allocation7 + $0x8] sm:$0xff]
    %v461 = vld [vmem:[#allocation7 + $0x10] sm:$0xff]
    %v462 = vld [vmem:[#allocation7 + $0x18] sm:$0xff]
    %v463 = vld [vmem:[#allocation7 + $0x20] sm:$0xff]
    %v464 = vld [vmem:[#allocation7 + $0x28] sm:$0xff]
    %v465 = vld [vmem:[#allocation7 + $0x30] sm:$0xff]
    %v466 = vld [vmem:[#allocation7 + $0x38] sm:$0xff]
    %v467 = vld [vmem:[#allocation7 + $0x40] sm:$0xff]
    %v468 = vld [vmem:[#allocation7 + $0x48] sm:$0xff]
    %v469 = vld [vmem:[#allocation7 + $0x50] sm:$0xff]
    %v470 = vld [vmem:[#allocation7 + $0x58] sm:$0xff]
    %v471 = vld [vmem:[#allocation7 + $0x60] sm:$0xff]
    %v472 = vld [vmem:[#allocation7 + $0x68] sm:$0xff]
    %v473 = vld [vmem:[#allocation7 + $0x70] sm:$0xff]
    %v474 = vld [vmem:[#allocation7 + $0x78] sm:$0xff]
    %v475 = vld [vmem:[#allocation9] sm:$0x1]
    %v477 = vlaneseq
    %v478 = vshrl.u32 %v477, 7
    %v479 = vsub.s32 0, %v478
    %v480 = vrot.slane %v475, %v479
    %482 = vmatprep.subr.mxu0 0.0
    %483 = vmatpush1.msra.mxu0 %v474
    %484 = vmatprep.subr.mxu0 0.0
    %485 = vmatpush1.msra.mxu0 %v473
    %486 = vmatprep.subr.mxu0 0.0
    %487 = vmatpush1.msra.mxu0 %v472
    %488 = vmatprep.subr.mxu0 0.0
    %489 = vmatpush1.msra.mxu0 %v471
    %490 = vmatprep.subr.mxu0 0.0
    %491 = vmatpush1.msra.mxu0 %v470
    %492 = vmatprep.subr.mxu0 0.0
    %493 = vmatpush1.msra.mxu0 %v469
    %494 = vmatprep.subr.mxu0 0.0
    %495 = vmatpush1.msra.mxu0 %v468
    %496 = vmatprep.subr.mxu0 0.0
    %497 = vmatpush1.msra.mxu0 %v467
    %498 = vmatprep.subr.mxu0 0.0
    %499 = vmatpush1.msra.mxu0 %v466
    %500 = vmatprep.subr.mxu0 0.0
    %501 = vmatpush1.msra.mxu0 %v465
    %502 = vmatprep.subr.mxu0 0.0
    %503 = vmatpush1.msra.mxu0 %v464
    %504 = vmatprep.subr.mxu0 0.0
    %505 = vmatpush1.msra.mxu0 %v463
    %506 = vmatprep.subr.mxu0 0.0
    %507 = vmatpush1.msra.mxu0 %v462
    %508 = vmatprep.subr.mxu0 0.0
    %509 = vmatpush1.msra.mxu0 %v461
    %510 = vmatprep.subr.mxu0 0.0
    %511 = vmatpush1.msra.mxu0 %v460
    %512 = vmatprep.subr.mxu0 0.0
    %513 = vmatpush1.msra.mxu0 %v459
    %514 = vmatprep.subr.mxu0 0.0
    %515 = vmatpush2.msra.mxu0 0.0
    %516 = vmatprep.subr.mxu0 0.0
    %517 = vmatpush2.msra.mxu0 0.0
    %518 = vmatprep.subr.mxu0 0.0
    %519 = vmatpush2.msra.mxu0 0.0
    %520 = vmatprep.subr.mxu0 0.0
    %521 = vmatpush2.msra.mxu0 0.0
    %522 = vmatprep.subr.mxu0 0.0
    %523 = vmatpush2.msra.mxu0 0.0
    %524 = vmatprep.subr.mxu0 0.0
    %525 = vmatpush2.msra.mxu0 0.0
    %526 = vmatprep.subr.mxu0 0.0
    %527 = vmatpush2.msra.mxu0 0.0
    %528 = vmatprep.subr.mxu0 0.0
    %529 = vmatpush2.msra.mxu0 0.0
    %530 = vmatprep.subr.mxu0 0.0
    %531 = vmatpush2.msra.mxu0 0.0
    %532 = vmatprep.subr.mxu0 0.0
    %533 = vmatpush2.msra.mxu0 0.0
    %534 = vmatprep.subr.mxu0 0.0
    %535 = vmatpush2.msra.mxu0 0.0
    %536 = vmatprep.subr.mxu0 0.0
    %537 = vmatpush2.msra.mxu0 0.0
    %538 = vmatprep.subr.mxu0 0.0
    %539 = vmatpush2.msra.mxu0 0.0
    %540 = vmatprep.subr.mxu0 0.0
    %541 = vmatpush2.msra.mxu0 0.0
    %542 = vmatprep.subr.mxu0 0.0
    %543 = vmatpush2.msra.mxu0 0.0
    %544 = vmatprep.subr.mxu0 0.0
    %545 = vmatpush2.msra.mxu0 0.0
    %546 = vmatprep.mubr.f32.mxu0 0.0
    %547 = vmatmul.mubr.f32.gmra.mxu0 %v284
    %v548 = vpop.f32.mrf.mxu0
    %v549 = vadd.f32 %v480, %v548
    %v550 = vpop.f32.mrf.mxu0
    %551 = vdwg.mxu0
    %552 = vst [vmem:[%s11] sm:$0xff] %v549
    %553 = vst [vmem:[%s12] sm:$0xff] %v458
    // Predicated region
    $region66: #{mlp_base_forward.1} parent=1 // pred_check
      _
    $region67: #{mlp_base_forward.1} parent=1 // pred_check_branch
      %555 = sbr.rel (0) target = $region69
    $region68: #{mlp_base_forward.1} parent=1 // pred_region
      _
    $region69: #{mlp_base_forward.1} parent=1 // pred_fallthru
      _
    // Predicated region
    $region70: #{mlp_base_forward.1} parent=1 // pred_check
      _
    $region71: #{mlp_base_forward.1} parent=1 // pred_check_branch
      %557 = sbr.rel (0) target = $region73
    $region72: #{mlp_base_forward.1} parent=1 // pred_region
      _
    $region73: #{mlp_base_forward.1} parent=1 // pred_fallthru
      _
    // Predicated region
    $region74: #{mlp_base_forward.1} parent=1 // pred_check
      _
    $region75: #{mlp_base_forward.1} parent=1 // pred_check_branch
      %559 = sbr.rel (0) target = $region77
    $region76: #{mlp_base_forward.1} parent=1 // pred_region
      _
    $region77: #{mlp_base_forward.1} parent=1 // pred_fallthru
      _
    // Predicated region
    $region78: #{mlp_base_forward.1} parent=1 // pred_check
      _
    $region79: #{mlp_base_forward.1} parent=1 // pred_check_branch
      %561 = sbr.rel (0) target = $region81
    $region80: #{mlp_base_forward.1} parent=1 // pred_region
      _
    $region81: #{mlp_base_forward.1} parent=1 // pred_fallthru
      _
    %562 = vsyncpa [#allocation3], 1
    %563 = vsyncpa [#allocation5], 1
    %564 = vsyncpa [#allocation8], 1

</llo_original>
